<compile_context>
chip_gen: v7x
topology: tpu7x:2x2x1
jax: 0.10.0
libtpu: 0.0.40
codegen_flags: <defaults>
</compile_context>

<pallas_src>
import numpy as np
import jax
import jax.numpy as jnp
from jax.experimental import pallas as pl
from jax.experimental.pallas import tpu as pltpu


def _channel_schedule(num_layers=4, input_depth=107, acoustic_variables=1):
    # Mirrors PyTorch: np.linspace(input_depth, acoustic_variables, num_layers+1, dtype=np.int8)
    # (np.int8 matches the original module; it would overflow for input_depth > 127.)
    ch = np.linspace(input_depth, acoustic_variables, num_layers + 1, dtype=np.int8)
    return [int(c) for c in ch]  # [107, 80, 54, 27, 1]


def _fold_affine(params):
    """Fold the activation-free 1x1-conv stack into one (C_in, C_out) weight + (1, C_out) bias."""
    w_fold, b_fold = params[0]
    for w, b in params[1:]:
        w_fold = w_fold @ w
        b_fold = b_fold @ w + b
    return w_fold, b_fold


def _fused_kernel(x_ref, w_ref, b_ref, o_ref):
    # x_ref: (nb, C_in, tn)   w_ref: (C_out, C_in)   b_ref: (C_out, 1)   o_ref: (nb, C_out, tn)
    w = w_ref[...]
    b = b_ref[...]
    for i in range(x_ref.shape[0]):        # static unroll over the images in this block (nb <= 16)
        y = jnp.dot(w, x_ref[i], preferred_element_type=jnp.float32) + b
        o_ref[i] = jax.nn.sigmoid(y).astype(o_ref.dtype)


def _round_up(a, m):
    return ((a + m - 1) // m) * m


def dense_cnn_2d_forward(x_nchw, params, *, tn=8192, compute_dtype=None):
    """x_nchw: (N, C_in, H, W); params: list of (W (C_in_l, C_out_l), b (1, C_out_l)).

    compute_dtype: optionally jnp.bfloat16 to halve the x read; only a win if the
    caller already produces bf16 upstream (a standalone cast adds an HBM pass).
    """
    N, C_in, H, W = x_nchw.shape
    hw = H * W
    out_dtype = x_nchw.dtype

    # Fold the whole affine stack offline (runs once; trivially small matmuls).
    w_fold, b_fold = _fold_affine(params)            # (C_in, C_out), (1, C_out)
    C_out = w_fold.shape[1]
    w_t = jnp.transpose(w_fold)                      # (C_out, C_in) -- stays VMEM-resident
    b_col = jnp.transpose(b_fold)                    # (C_out, 1), kept f32 for the bias add

    # NCHW -> (N, C_in, HW): free reshape, no transpose / extra HBM round trip.
    x_flat = x_nchw.reshape(N, C_in, hw)
    if compute_dtype is not None:
        x_flat = x_flat.astype(compute_dtype)
        w_t = w_t.astype(compute_dtype)

    itemsize = jnp.dtype(x_flat.dtype).itemsize
    out_itemsize = jnp.dtype(out_dtype).itemsize

    # ---- Tile selection (bandwidth bound: big DMAs, few grid steps) ----
    tn_cap = max(128, (min(tn, 16384) // 128) * 128)   # lane-aligned, VMEM-safe on all gens
    hw128 = _round_up(hw, 128)

    target_x_block_bytes = 4 << 20                      # ~4 MiB of x per grid step
    if hw128 <= tn_cap:
        # Small images: whole spatial extent per image; fold several images per
        # block so each DMA still moves a decent chunk instead of ~100 KiB.
        tn_eff = hw128
        nb = max(1, min(N, 16, target_x_block_bytes // (C_in * tn_eff * itemsize)))
    else:
        tn_eff = tn_cap
        nb = 1

    grid_n = pl.cdiv(N, nb)
    grid_s = pl.cdiv(hw, tn_eff)
    # Keep >=2 grid steps when possible so v7x's two TensorCores both get work.
    if grid_n * grid_s < 2 and N > 1:
        nb = (N + 1) // 2
        grid_n = pl.cdiv(N, nb)
    grid = (grid_n, grid_s)

    # Explicit scoped-VMEM budget: double-buffered x/out blocks + weights + headroom.
    x_blk_bytes = nb * C_in * tn_eff * itemsize
    o_blk_bytes = nb * C_out * tn_eff * out_itemsize
    w_bytes = int(w_t.size) * jnp.dtype(w_t.dtype).itemsize
    b_bytes = int(b_col.size) * jnp.dtype(b_col.dtype).itemsize
    need = 2 * (x_blk_bytes + o_blk_bytes) + w_bytes + b_bytes
    vmem_limit = int(min(max(need + (4 << 20), 16 << 20), 48 << 20))

    cost = pl.CostEstimate(
        flops=2 * N * hw * C_in * C_out,
        transcendentals=N * hw * C_out,
        bytes_accessed=N * C_in * hw * itemsize + N * C_out * hw * out_itemsize
                       + w_bytes + b_bytes,
    )

    out = pl.pallas_call(
        _fused_kernel,
        out_shape=jax.ShapeDtypeStruct((N, C_out, hw), out_dtype),
        grid_spec=pltpu.PrefetchScalarGridSpec(
            num_scalar_prefetch=0,
            grid=grid,
            in_specs=[
                # Ragged tails (hw % tn_eff, N % nb) are Pallas boundary blocks:
                # OOB input lanes are never used, OOB output writes are dropped.
                pl.BlockSpec((nb, C_in, tn_eff), lambda n, j: (n, 0, j)),
                pl.BlockSpec(w_t.shape, lambda n, j: (0, 0)),    # constant map: VMEM-resident
                pl.BlockSpec(b_col.shape, lambda n, j: (0, 0)),
            ],
            out_specs=pl.BlockSpec((nb, C_out, tn_eff), lambda n, j: (n, 0, j)),
        ),
        compiler_params=pltpu.CompilerParams(
            dimension_semantics=("parallel", "parallel"),
            vmem_limit_bytes=vmem_limit),
        cost_estimate=cost,
    )(x_flat, w_t, b_col)

    return out.reshape(N, C_out, H, W)


def init_params(key, channels):
    """Deterministic synthetic init of the 1x1-conv weights in (C_in, C_out) matmul form."""
    params = []
    for i in range(len(channels) - 1):
        c_in, c_out = channels[i], channels[i + 1]
        key, kw, kb = jax.random.split(key, 3)
        scale = 1.0 / np.sqrt(c_in)
        w = jax.random.uniform(kw, (c_in, c_out), jnp.float32, -scale, scale)
        b = jax.random.uniform(kb, (1, c_out), jnp.float32, -scale, scale)
        params.append((w, b))
    return params


def reference_forward(x_nchw, params):
    # Pure-JAX reference mirroring the PyTorch module: sequential 1x1 convs + final sigmoid.
    N, C, H, W = x_nchw.shape
    h = jnp.transpose(x_nchw, (0, 2, 3, 1)).reshape(-1, C)
    for w, b in params:
        h = h @ w + b
    h = jax.nn.sigmoid(h)
    return jnp.transpose(h.reshape(N, H, W, -1), (0, 3, 1, 2))


if __name__ == "__main__":
    channels = _channel_schedule(num_layers=4, input_depth=107, acoustic_variables=1)

    key = jax.random.PRNGKey(0)
    key, kx = jax.random.split(key)

    # Case 1: lane-aligned spatial extent (module-implied C_in = 107).
    N, H, W = 2, 16, 16
    x = jax.random.normal(kx, (N, channels[0], H, W), dtype=jnp.float32)
    params = init_params(key, channels)

    fwd = jax.jit(lambda xx: dense_cnn_2d_forward(xx, params))
    out = jax.block_until_ready(fwd(x))
    ref = reference_forward(x, params)
    assert out.shape == (N, 1, H, W), out.shape
    # Folded-affine result vs. sequential reference: same math, tiny f32 reassociation error.
    np.testing.assert_allclose(np.asarray(out), np.asarray(ref), rtol=1e-4, atol=1e-5)

    # Case 2: ragged H*W (not a multiple of 128) + odd batch -> exercises the
    # no-pad boundary-block path and the batch-folded blocks.
    key, kx2 = jax.random.split(key)
    N2, H2, W2 = 3, 9, 13
    x2 = jax.random.normal(kx2, (N2, channels[0], H2, W2), dtype=jnp.float32)
    out2 = jax.block_until_ready(fwd(x2))
    ref2 = reference_forward(x2, params)
    assert out2.shape == (N2, 1, H2, W2), out2.shape
    np.testing.assert_allclose(np.asarray(out2), np.asarray(ref2), rtol=1e-4, atol=1e-5)

    print("KERNEL_OK")
</pallas_src>

<mosaic_0001>
module attributes {stable_mosaic.version = 11 : i64} {
  func.func @_fused_kernel(%arg0: i32, %arg1: i32, %arg2: memref<1x107x256xf32, #tpu.memory_space<vmem>>, %arg3: memref<1x107xf32, #tpu.memory_space<vmem>>, %arg4: memref<1x1xf32, #tpu.memory_space<vmem>>, %arg5: memref<1x1x256xf32, #tpu.memory_space<vmem>>) attributes {dimension_semantics = [#tpu.dimension_semantics<parallel>, #tpu.dimension_semantics<parallel>], iteration_bounds = array<i64: 2, 1>, scalar_prefetch = 0 : i64, scratch_operands = 0 : i64, tpu.core_type = #tpu.core_type<tc>, window_params = [{transform_indices = @transform_0, window_bounds = array<i64: 1, 107, 256>}, {pipeline_mode = #tpu.pipeline_mode<synchronous>, transform_indices = @transform_1, window_bounds = array<i64: 1, 107>}, {pipeline_mode = #tpu.pipeline_mode<synchronous>, transform_indices = @transform_2, window_bounds = array<i64: 1, 1>}, {transform_indices = @transform_3, window_bounds = array<i64: 1, 1, 256>}]} {
    %c0 = arith.constant 0 : index
    %c0_0 = arith.constant 0 : index
    %0 = vector.load %arg3[%c0, %c0_0] : memref<1x107xf32, #tpu.memory_space<vmem>>, vector<1x107xf32>
    %c0_1 = arith.constant 0 : index
    %c0_2 = arith.constant 0 : index
    %1 = vector.load %arg4[%c0_1, %c0_2] : memref<1x1xf32, #tpu.memory_space<vmem>>, vector<1x1xf32>
    %c0_3 = arith.constant 0 : index
    %c0_4 = arith.constant 0 : index
    %c0_5 = arith.constant 0 : index
    %2 = vector.load %arg2[%c0_3, %c0_4, %c0_5] : memref<1x107x256xf32, #tpu.memory_space<vmem>>, vector<1x107x256xf32>
    %3 = vector.shape_cast %2 : vector<1x107x256xf32> to vector<107x256xf32>
    %cst = arith.constant dense<0.000000e+00> : vector<1x256xf32>
    %4 = tpu.matmul %0, %3, %cst {dimension_numbers = #tpu.dot_dimension_numbers<[1], [0], [0], [1], [0, 0, 1, 1], [], []>} : vector<1x107xf32>, vector<107x256xf32>, vector<1x256xf32> -> vector<1x256xf32>
    %5 = vector.broadcast %1 : vector<1x1xf32> to vector<1x256xf32>
    %6 = arith.addf %4, %5 : vector<1x256xf32>
    %7 = arith.negf %6 : vector<1x256xf32>
    %8 = math.exp %7 : vector<1x256xf32>
    %cst_6 = arith.constant 1.000000e+00 : f32
    %9 = vector.broadcast %cst_6 : f32 to vector<1x256xf32>
    %10 = arith.addf %9, %8 : vector<1x256xf32>
    %11 = arith.divf %9, %10 : vector<1x256xf32>
    %c0_7 = arith.constant 0 : index
    %c0_8 = arith.constant 0 : index
    %c0_9 = arith.constant 0 : index
    %12 = vector.load %arg5[%c0_7, %c0_8, %c0_9] : memref<1x1x256xf32, #tpu.memory_space<vmem>>, vector<1x1x256xf32>
    %13 = vector.shape_cast %12 : vector<1x1x256xf32> to vector<1x256xf32>
    %14 = vector.shape_cast %11 : vector<1x256xf32> to vector<1x1x256xf32>
    tpu.vector_store %arg5[%c0_7, %c0_8, %c0_9], %14 {strides = array<i32>} : memref<1x1x256xf32, #tpu.memory_space<vmem>>, vector<1x1x256xf32>,
    return
  }
  func.func @transform_0(%arg0: i32, %arg1: i32) -> (i32, i32, i32) {
    %c0_i32 = arith.constant 0 : i32
    %c0_i32_0 = arith.constant 0 : i32
    return %arg0, %c0_i32, %arg1 : i32, i32, i32
  }
  func.func @transform_1(%arg0: i32, %arg1: i32) -> (i32, i32) {
    %c0_i32 = arith.constant 0 : i32
    %c0_i32_0 = arith.constant 0 : i32
    %c0_i32_1 = arith.constant 0 : i32
    return %c0_i32, %c0_i32_0 : i32, i32
  }
  func.func @transform_2(%arg0: i32, %arg1: i32) -> (i32, i32) {
    %c0_i32 = arith.constant 0 : i32
    %c0_i32_0 = arith.constant 0 : i32
    %c0_i32_1 = arith.constant 0 : i32
    return %c0_i32, %c0_i32_0 : i32, i32
  }
  func.func @transform_3(%arg0: i32, %arg1: i32) -> (i32, i32, i32) {
    %c0_i32 = arith.constant 0 : i32
    %c0_i32_0 = arith.constant 0 : i32
    return %arg0, %c0_i32, %arg1 : i32, i32, i32
  }
}

</mosaic_0001>

<llo_original>
// kernel: _lambda_.1
$region0: #{_lambda_.1}
  #allocation0 [shape = 'u32[]', space=smem, size = 0x4, offset = 0x4, fixed_abs, tag = 'smem constant byte address 0x4 - core index']
  #allocation1 [shape = 'u32[144,128]{1,0:T(1,128)}', space=vmem, size = 0x12000, scoped, tag = 'internal scratch']
  #allocation2 [shape = 'f32[1,1]{1,0:T(1,128)S(1)}', space=vmem, size = 0x200, scoped, tag = 'scoped memory for _lambda_.1']
  %s0 = inlined_call_operand.vmem [shape: f32[2,107,256], index: 0, kind: input, shape index: {}]
  %s1 = inlined_call_operand.vmem [shape: f32[1,107], index: 1, kind: input, shape index: {}]
  %s2 = inlined_call_operand.<no memory space> [shape: f32[1,1], index: 2, kind: input, shape index: {}]
  %s3 = inlined_call_operand.vmem [shape: f32[2,1,256], index: 3, kind: output, shape index: {}]
  %s4 = sld [smem:[#allocation0]]
  $region45: #{_lambda_.1} parent=0
    _
  %s6 = ssub.s32 1, %s4
  %s7 = scalar_select 0, %s6, %s4
  %v8 = vstv %s2
  %9 = vst [vmem:[#allocation2] sm:$0x1] %v8
  loop: start=0, step=1, limit=4
  $region2: #{_lambda_.1} parent=0 // loop_pre_header
    _
  $region3: #{_lambda_.1} parent=0 // loop_header
    %s11 = sphi 0, %s15
    %p12 = scmp.ge.s32.totalorder %s11, 4
    %s18 = sphi 0, %s30
    %s19 = sphi 0, %s26
    %s20 = sphi 0, %s18
    %s21 = sphi 0, %s19
    %s22 = sphi 0, %s20
    %s23 = sphi 0, %s21
    %s35 = sphi 0, %s37
    %s38 = sphi 0, %s35
    %s39 = sphi 0, %s38
    %s55 = sphi 0, %s39
    %s59 = sphi 0, %s59
    %s61 = sphi 0, %s59
    %s62 = sphi 0, %s61
    %s76 = sphi 0, %s62
    %s80 = sphi 0, %s80
    %s82 = sphi 0, %s80
    %s83 = sphi 0, %s82
    %s97 = sphi 0, %s83
    %s105 = sphi 0, %s107
    %s108 = sphi 0, %s105
    %s109 = sphi 0, %s108
    %s125 = sphi 0, %s109
  $region4: #{_lambda_.1} parent=0 // loop_header_branch
    %14 = sbr.rel (%p12) target = $region8
  $region5: #{_lambda_.1} parent=0 // loop_body
    %s16 = ssub.s32 %s11, 1
    %s17 = ssub.s32 %s11, 2
    %s24 = sadd.s32 1, %s19
    %p25 = scmp.ge.s32.totalorder %s24, 1
    %s26 = scalar_select %p25, 0, %s24
    %s27 = sadd.s32 1, %s18
    %s28 = scalar_select %p25, %s27, %s18
    %p29 = scmp.ge.s32.totalorder %s28, 2
    %s30 = scalar_select %p29, 0, %s28
    %s31 = ssub.s32 %s18, %s30
    %s32 = ssub.s32 %s19, %s26
    %s33 = sor.u32 %s31, %s32
    %p34 = scmp.eq.s32.totalorder %s33, 0
    %s36 = sadd.s32 %s35, 1
    %s37 = scalar_select %p34, %s35, %s36
    %p40 = pneg %p34
    %p41 = scmp.eq.s32.totalorder %s11, 1
    %p42 = por %p40, %p41
    %p43 = scmp.ne.s32.totalorder %s35, %s38
    %p44 = scmp.eq.s32.totalorder %s11, 0
    %p45 = por %p43, %p44
    %p46 = scmp.ne.s32.totalorder %s35, %s38
    %p47 = scmp.eq.s32.totalorder %s16, 1
    %p48 = por %p46, %p47
    %p49 = scmp.ne.s32.totalorder %s38, %s39
    %p50 = scmp.eq.s32.totalorder %s16, 0
    %p51 = por %p49, %p50
    %p52 = scmp.ne.s32.totalorder %s38, %s39
    %p53 = scmp.eq.s32.totalorder %s17, 1
    %p54 = por %p52, %p53
    %p56 = scmp.ne.s32.totalorder %s39, %s55
    %p57 = scmp.eq.s32.totalorder %s17, 0
    %p58 = por %p56, %p57
    %s60 = sadd.s32 %s59, 1
    %p63 = scmp.eq.s32.totalorder %s11, 1
    %p64 = scmp.ne.s32.totalorder %s59, %s61
    %p65 = scmp.eq.s32.totalorder %s11, 0
    %p66 = por %p64, %p65
    %p67 = scmp.ne.s32.totalorder %s59, %s61
    %p68 = scmp.eq.s32.totalorder %s16, 1
    %p69 = por %p67, %p68
    %p70 = scmp.ne.s32.totalorder %s61, %s62
    %p71 = scmp.eq.s32.totalorder %s16, 0
    %p72 = por %p70, %p71
    %p73 = scmp.ne.s32.totalorder %s61, %s62
    %p74 = scmp.eq.s32.totalorder %s17, 1
    %p75 = por %p73, %p74
    %p77 = scmp.ne.s32.totalorder %s62, %s76
    %p78 = scmp.eq.s32.totalorder %s17, 0
    %p79 = por %p77, %p78
    %s81 = sadd.s32 %s80, 1
    %p84 = scmp.eq.s32.totalorder %s11, 1
    %p85 = scmp.ne.s32.totalorder %s80, %s82
    %p86 = scmp.eq.s32.totalorder %s11, 0
    %p87 = por %p85, %p86
    %p88 = scmp.ne.s32.totalorder %s80, %s82
    %p89 = scmp.eq.s32.totalorder %s16, 1
    %p90 = por %p88, %p89
    %p91 = scmp.ne.s32.totalorder %s82, %s83
    %p92 = scmp.eq.s32.totalorder %s16, 0
    %p93 = por %p91, %p92
    %p94 = scmp.ne.s32.totalorder %s82, %s83
    %p95 = scmp.eq.s32.totalorder %s17, 1
    %p96 = por %p94, %p95
    %p98 = scmp.ne.s32.totalorder %s83, %s97
    %p99 = scmp.eq.s32.totalorder %s17, 0
    %p100 = por %p98, %p99
    %s101 = ssub.s32 %s18, %s30
    %s102 = ssub.s32 %s19, %s26
    %s103 = sor.u32 %s101, %s102
    %p104 = scmp.eq.s32.totalorder %s103, 0
    %s106 = sadd.s32 %s105, 1
    %s107 = scalar_select %p104, %s105, %s106
    %p110 = pneg %p104
    %p111 = scmp.eq.s32.totalorder %s11, 1
    %p112 = por %p110, %p111
    %p113 = scmp.ne.s32.totalorder %s105, %s108
    %p114 = scmp.eq.s32.totalorder %s11, 0
    %p115 = por %p113, %p114
    %p116 = scmp.ne.s32.totalorder %s105, %s108
    %p117 = scmp.eq.s32.totalorder %s16, 1
    %p118 = por %p116, %p117
    %p119 = scmp.ne.s32.totalorder %s108, %s109
    %p120 = scmp.eq.s32.totalorder %s16, 0
    %p121 = por %p119, %p120
    %p122 = scmp.ne.s32.totalorder %s108, %s109
    %p123 = scmp.eq.s32.totalorder %s17, 1
    %p124 = por %p122, %p123
    %p126 = scmp.ne.s32.totalorder %s109, %s125
    %p127 = scmp.eq.s32.totalorder %s17, 0
    %p128 = por %p126, %p127
    %p129 = scmp.le.s32.totalorder 1, %s11
    %p130 = scmp.lt.s32.totalorder %s11, 3
    %p131 = pnand %p129, %p130
    %p132 = pneg %p131
    // Predicated region
    $region9: #{_lambda_.1} parent=5 // pred_check
      _
    $region10: #{_lambda_.1} parent=5 // pred_check_branch
      %134 = sbr.rel (%p131) target = $region12
    $region11: #{_lambda_.1} parent=5 // pred_region
      %s135 = ssub.s32 %s11, 1
      // Predicated region
      $region13: #{_lambda_.1} parent=11 // pred_check
        %p136 = pneg %p72
      $region14: #{_lambda_.1} parent=11 // pred_check_branch
        %138 = sbr.rel (%p136) target = $region16
      $region15: #{_lambda_.1} parent=11 // pred_region
        _
      $region16: #{_lambda_.1} parent=11 // pred_fallthru
        _
      // Predicated region
      $region17: #{_lambda_.1} parent=11 // pred_check
        %p139 = pneg %p93
      $region18: #{_lambda_.1} parent=11 // pred_check_branch
        %141 = sbr.rel (%p139) target = $region20
      $region19: #{_lambda_.1} parent=11 // pred_region
        _
      $region20: #{_lambda_.1} parent=11 // pred_fallthru
        _
    $region12: #{_lambda_.1} parent=5 // pred_fallthru
      _
    %p142 = scmp.lt.s32.totalorder %s11, 2
    // Predicated region
    $region21: #{_lambda_.1} parent=5 // pred_check
      %p143 = pneg %p142
    $region22: #{_lambda_.1} parent=5 // pred_check_branch
      %145 = sbr.rel (%p143) target = $region24
    $region23: #{_lambda_.1} parent=5 // pred_region
      // Predicated region
      $region25: #{_lambda_.1} parent=23 // pred_check
        %p146 = pneg %p45
      $region26: #{_lambda_.1} parent=23 // pred_check_branch
        %148 = sbr.rel (%p146) target = $region28
      $region27: #{_lambda_.1} parent=23 // pred_region
        %s149 = smul.u32 2, %s19
        %p150 = scmp.lt.s32.totalorder %s18, 1
        %s151 = scalar_select %p150, %s18, 1
        %p152 = scmp.lt.s32.totalorder %s149, 1
        %s153 = scalar_select %p152, %s149, 1
        %s154 = smul.addr %s151, 28
        %s155 = sadd.s32 %s153, %s154
        %s156 = smul.addr %s155, 8
        %s157 = scalar_lea.vmem %s0, %s156
        %s158 = smul.u32 2, %s19
      $region28: #{_lambda_.1} parent=23 // pred_fallthru
        _
    $region24: #{_lambda_.1} parent=5 // pred_fallthru
      _
    %p159 = scmp.le.s32.totalorder 1, %s11
    %p160 = scmp.lt.s32.totalorder %s11, 3
    %p161 = pnand %p159, %p160
    %p162 = pneg %p161
    // Predicated region
    $region29: #{_lambda_.1} parent=5 // pred_check
      _
    $region30: #{_lambda_.1} parent=5 // pred_check_branch
      %164 = sbr.rel (%p161) target = $region32
    $region31: #{_lambda_.1} parent=5 // pred_region
      %s165 = ssub.s32 %s11, 1
      %s166 = smul.u32 2, %s21
      %p167 = scmp.lt.s32.totalorder %s20, 1
      %s168 = scalar_select %p167, %s20, 1
      %p169 = scmp.lt.s32.totalorder %s166, 1
      %s170 = scalar_select %p169, %s166, 1
      %s171 = smul.addr %s168, 28
      %s172 = sadd.s32 %s170, %s171
      %s173 = smul.addr %s172, 8
      %s174 = scalar_lea.vmem %s0, %s173
      %p175 = pneg %p51
      %p176 = pneg %p48
      %p177 = pneg %p72
      %p178 = pneg %p69
      %p179 = pneg %p93
      %p180 = pneg %p90
      %p181 = pneg %p121
      %p182 = pneg %p118
      %s183 = smul.u32 2, %s21
      %p184 = scmp.lt.s32.totalorder %s20, 1
      %s185 = scalar_select %p184, %s20, 1
      %p186 = scmp.lt.s32.totalorder %s183, 1
      %s187 = scalar_select %p186, %s183, 1
      %s188 = smul.addr %s185, 2
      %s189 = sadd.s32 %s187, %s188
      %s190 = scalar_lea.vmem %s3, %s189
      %s191 = smul.u32 2, %s21
      %p192 = scmp.lt.s32.totalorder %s20, 1
      %s193 = scalar_select %p192, %s20, 1
      %p194 = scmp.lt.s32.totalorder %s191, 1
      %s195 = scalar_select %p194, %s191, 1
      %s196 = smul.addr %s193, 28
      %s197 = sadd.s32 %s195, %s196
      %s198 = smul.addr %s197, 8
      %s199 = scalar_lea.vmem %s0, %s198
      %s200 = smul.u32 2, %s21
      %s201 = smul.u32 2, %s21
      %p202 = scmp.lt.s32.totalorder %s20, 1
      %s203 = scalar_select %p202, %s20, 1
      %p204 = scmp.lt.s32.totalorder %s201, 1
      %s205 = scalar_select %p204, %s201, 1
      %s206 = smul.addr %s203, 2
      %s207 = sadd.s32 %s205, %s206
      %s208 = scalar_lea.vmem %s3, %s207
      %s209 = smul.u32 2, %s21
      %v210 = vld [vmem:[%s1] sm:$0x1]
      %v211 = vld [vmem:[#allocation2] sm:$0x1]
      %v212 = vld [vmem:[%s199] sm:$0xff]
      %v213 = vld [vmem:[%s199 + $0x8] sm:$0xff]
      %v214 = vld [vmem:[%s199 + $0x10] sm:$0xff]
      %v215 = vld [vmem:[%s199 + $0x18] sm:$0xff]
      %v216 = vld [vmem:[%s199 + $0x20] sm:$0xff]
      %v217 = vld [vmem:[%s199 + $0x28] sm:$0xff]
      %v218 = vld [vmem:[%s199 + $0x30] sm:$0xff]
      %v219 = vld [vmem:[%s199 + $0x38] sm:$0xff]
      %v220 = vld [vmem:[%s199 + $0x40] sm:$0xff]
      %v221 = vld [vmem:[%s199 + $0x48] sm:$0xff]
      %v222 = vld [vmem:[%s199 + $0x50] sm:$0xff]
      %v223 = vld [vmem:[%s199 + $0x58] sm:$0xff]
      %v224 = vld [vmem:[%s199 + $0x60] sm:$0xff]
      %v225 = vld [vmem:[%s199 + $0x68] sm:$0xff]
      %v226 = vld [vmem:[%s199 + $0x70] sm:$0xff]
      %v227 = vld [vmem:[%s199 + $0x78] sm:$0xff]
      %v228 = vld [vmem:[%s199 + $0x80] sm:$0xff]
      %v229 = vld [vmem:[%s199 + $0x88] sm:$0xff]
      %v230 = vld [vmem:[%s199 + $0x90] sm:$0xff]
      %v231 = vld [vmem:[%s199 + $0x98] sm:$0xff]
      %v232 = vld [vmem:[%s199 + $0xa0] sm:$0xff]
      %v233 = vld [vmem:[%s199 + $0xa8] sm:$0xff]
      %v234 = vld [vmem:[%s199 + $0xb0] sm:$0xff]
      %v235 = vld [vmem:[%s199 + $0xb8] sm:$0xff]
      %v236 = vld [vmem:[%s199 + $0xc0] sm:$0xff]
      %v237 = vld [vmem:[%s199 + $0xc8] sm:$0xff]
      %v238 = vld [vmem:[%s199 + $0xd0] sm:$0x7]
      %v239 = vld [vmem:[%s199 + $0xd8] sm:$0x7]
      %241 = vset.pattern.permute.xlu0 0
      %242 = vperm.xlu0 %241, %v211
      %v243 = vpop.permute.xlu0 %242
      %v245 = vlaneseq
      %v246 = vshrl.u32 %v245, 7
      %v247 = vsub.s32 0, %v246
      %v248 = vrot.slane %v243, %v247
      %vm249 = vcmask 875520
      %v251 = vsel %vm249, %v210, 0
      %vm253 = vcmask 1042432
      %v255 = vsel %vm253, %v238, 0
      %v258 = vsel %vm253, %v239, 0
      %260 = vmatprep.subr.mxu0 %v213
      %261 = vmatpush1.msra.mxu0 %v212
      %262 = vmatprep.subr.mxu0 %v215
      %263 = vmatpush1.msra.mxu0 %v214
      %264 = vmatprep.subr.mxu0 %v217
      %265 = vmatpush1.msra.mxu0 %v216
      %266 = vmatprep.subr.mxu0 %v219
      %267 = vmatpush1.msra.mxu0 %v218
      %268 = vmatprep.subr.mxu0 %v221
      %269 = vmatpush1.msra.mxu0 %v220
      %270 = vmatprep.subr.mxu0 %v223
      %271 = vmatpush1.msra.mxu0 %v222
      %272 = vmatprep.subr.mxu0 %v225
      %273 = vmatpush1.msra.mxu0 %v224
      %274 = vmatprep.subr.mxu0 %v227
      %275 = vmatpush1.msra.mxu0 %v226
      %276 = vmatprep.subr.mxu0 %v229
      %277 = vmatpush1.msra.mxu0 %v228
      %278 = vmatprep.subr.mxu0 %v231
      %279 = vmatpush1.msra.mxu0 %v230
      %280 = vmatprep.subr.mxu0 %v233
      %281 = vmatpush1.msra.mxu0 %v232
      %282 = vmatprep.subr.mxu0 %v235
      %283 = vmatpush1.msra.mxu0 %v234
      %284 = vmatprep.subr.mxu0 %v237
      %285 = vmatpush1.msra.mxu0 %v236
      %286 = vmatprep.subr.mxu0 %v258
      %287 = vmatpush1.msra.mxu0 %v255
      %288 = vmatprep.subr.mxu0 0.0
      %289 = vmatpush1.msra.mxu0 0.0
      %290 = vmatprep.subr.mxu0 0.0
      %291 = vmatpush1.msra.mxu0 0.0
      %292 = vmatprep.subr.mxu0 0.0
      %293 = vmatpush1.msra.mxu0 0.0
      %294 = vmatprep.subr.mxu0 0.0
      %295 = vmatpush1.msra.mxu0 0.0
      %296 = vmatprep.subr.mxu0 0.0
      %297 = vmatpush1.msra.mxu0 0.0
      %298 = vmatprep.subr.mxu0 0.0
      %299 = vmatpush1.msra.mxu0 0.0
      %300 = vmatprep.subr.mxu0 0.0
      %301 = vmatpush1.msra.mxu0 0.0
      %302 = vmatprep.subr.mxu0 0.0
      %303 = vmatpush1.msra.mxu0 0.0
      %304 = vmatprep.subr.mxu0 0.0
      %305 = vmatpush1.msra.mxu0 0.0
      %306 = vmatprep.subr.mxu0 0.0
      %307 = vmatpush1.msra.mxu0 0.0
      %308 = vmatprep.subr.mxu0 0.0
      %309 = vmatpush1.msra.mxu0 0.0
      %310 = vmatprep.subr.mxu0 0.0
      %311 = vmatpush1.msra.mxu0 0.0
      %312 = vmatprep.subr.mxu0 0.0
      %313 = vmatpush1.msra.mxu0 0.0
      %314 = vmatprep.subr.mxu0 0.0
      %315 = vmatpush1.msra.mxu0 0.0
      %316 = vmatprep.subr.mxu0 0.0
      %317 = vmatpush1.msra.mxu0 0.0
      %318 = vmatprep.subr.mxu0 0.0
      %319 = vmatpush1.msra.mxu0 0.0
      %320 = vmatprep.subr.mxu0 0.0
      %321 = vmatpush1.msra.mxu0 0.0
      %322 = vmatprep.subr.mxu0 0.0
      %323 = vmatpush1.msra.mxu0 0.0
      %324 = vmatprep.mubr.f32.mxu0 0.0
      %325 = vmatmul.mubr.f32.gmra.mrb[0].mxu0 %v251
      %v326 = vpop.f32.mrb[0].mxu0
      %v327 = vadd.f32 %v248, %v326
      %v328 = vpop.f32.mrb[0].mxu0
      %v329 = vadd.f32 %v248, %v328
      %330 = vdwg.mxu0
      %v331 = vxor.u32 %v327, 2147483648
      %v332 = vxor.u32 %v329, 2147483648
      %v333 = vmul.f32 %v331, 1.442695
      %v334 = vpow.pop %v333
      %v335 = vmul.f32 %v332, 1.442695
      %v336 = vpow.pop %v335
      %v337 = vadd.f32 %v334, 1.0
      %v338 = vadd.f32 %v336, 1.0
      %v339 = vrcp.pop %v337
      %v340 = vmul.f32 1.0, %v339
      %v341 = vrcp.pop %v338
      %v342 = vmul.f32 1.0, %v341
      %v345 = vcombine.low %v340, %v342
      %v347 = vunpack.c.l.s4 1966171168
      %v348 = vunpack.c.0.s8 %v347
      %v349 = vlaneseq
      %v350 = vshrl.u32 %v349, 7
      %v351 = vsub.s32 %v348, %v350
      %v352 = vrot.slane %v345, %v351
      %v354 = vunpack.c.l.s4 1966171168
      %v355 = vunpack.c.0.s8 %v354
      %v356 = vlaneseq
      %v357 = vshrl.u32 %v356, 7
      %v358 = vsub.s32 %v355, %v357
      %v359 = vrot.slane %v352, %v358
      %v361 = vlaneseq
      %vm362 = vcmp.ge.s32.totalorder %v361, 0
      %vm363 = vcmp.lt.s32.totalorder %v361, 256
      %vm364 = vmand %vm362, %vm363
      %365 = vst.msk [vmem:[%s208] sm:$0x3] %vm364, %v359
      %s366 = smul.u32 2, %s21
      %p367 = scmp.lt.s32.totalorder %s20, 1
      %s368 = scalar_select %p367, %s20, 1
      %p369 = scmp.lt.s32.totalorder %s366, 1
      %s370 = scalar_select %p369, %s366, 1
      %s371 = smul.addr %s368, 2
      %s372 = sadd.s32 %s370, %s371
      %s373 = scalar_lea.vmem %s3, %s372
      // Predicated region
      $region33: #{_lambda_.1} parent=31 // pred_check
        %p374 = pneg %p118
      $region34: #{_lambda_.1} parent=31 // pred_check_branch
        %376 = sbr.rel (%p374) target = $region36
      $region35: #{_lambda_.1} parent=31 // pred_region
        %s377 = smul.u32 2, %s21
      $region36: #{_lambda_.1} parent=31 // pred_fallthru
        _
    $region32: #{_lambda_.1} parent=5 // pred_fallthru
      _
    %p378 = scmp.le.s32.totalorder 2, %s11
    // Predicated region
    $region37: #{_lambda_.1} parent=5 // pred_check
      %p379 = pneg %p378
    $region38: #{_lambda_.1} parent=5 // pred_check_branch
      %381 = sbr.rel (%p379) target = $region40
    $region39: #{_lambda_.1} parent=5 // pred_region
      %s382 = ssub.s32 %s11, 2
      // Predicated region
      $region41: #{_lambda_.1} parent=39 // pred_check
        %p383 = pneg %p124
      $region42: #{_lambda_.1} parent=39 // pred_check_branch
        %385 = sbr.rel (%p383) target = $region44
      $region43: #{_lambda_.1} parent=39 // pred_region
        %s386 = smul.u32 2, %s23
        %p387 = scmp.lt.s32.totalorder %s22, 1
        %s388 = scalar_select %p387, %s22, 1
        %p389 = scmp.lt.s32.totalorder %s386, 1
        %s390 = scalar_select %p389, %s386, 1
        %s391 = smul.addr %s388, 2
        %s392 = sadd.s32 %s390, %s391
        %s393 = scalar_lea.vmem %s3, %s392
      $region44: #{_lambda_.1} parent=39 // pred_fallthru
        _
    $region40: #{_lambda_.1} parent=5 // pred_fallthru
      _
  $region6: #{_lambda_.1} parent=0 // loop_footer
    %s15 = sadd.s32 1, %s11
  $region7: #{_lambda_.1} parent=0 // loop_footer_branch
    %10 = sbr.rel target = $region3
  $region8: #{_lambda_.1} parent=0 // loop_exit
    _

</llo_original>
